<compile_context>
chip_gen: v5e
topology: v5e:2x2
jax: 0.10.0
libtpu: 0.0.40
codegen_flags: <defaults>
</compile_context>

<pallas_src>
import functools

import jax
import jax.numpy as jnp
from jax.experimental import pallas as pl
from jax.experimental.pallas import tpu as pltpu


def _round_up(x, m):
    return (x + m - 1) // m * m


# ----------------------------- Pallas kernel --------------------------------
def _decoder_kernel(ids_ref, h0_ref, c0_ref, enc_ref,
                    w_misc_ref, w_xh_ref, bias_ref,
                    logp_ref, h_new_ref, c_new_ref,
                    h_sc, c_sc, *, meta):
    H, V, ML, L = meta["H"], meta["V"], meta["ML"], meta["L"]
    row_attn, row_comb, row_out = meta["row_attn"], meta["row_comb"], meta["row_out"]
    VH = V + H
    B = h_sc.shape[1]

    t = pl.program_id(0)

    # ---- load incoming recurrent state into VMEM scratch at the first step ----
    @pl.when(t == 0)
    def _():
        h_sc[...] = h0_ref[...]
        c_sc[...] = c0_ref[...]

    # ---- one-hot token selector (embedding realized as one_hot @ folded tables) ----
    ids = ids_ref[0]                                               # (B, 1) int32
    vocab_iota = jax.lax.broadcasted_iota(jnp.int32, (B, V), 1)    # (B, V)
    one_hot = (ids == vocab_iota).astype(jnp.bfloat16)             # (B, V)
    # dropout: eval-mode identity

    h_l0 = h_sc[0].astype(jnp.bfloat16)                            # (B, H)

    # ---- attention logits: ONE push  [one_hot | h0] @ [emb@We ; Wh] + b ----
    xa = jnp.concatenate([one_hot, h_l0], axis=1)                  # (B, V+H)
    attn_logits = (jnp.dot(xa, w_misc_ref[row_attn:row_attn + VH, 0:ML],
                           preferred_element_type=jnp.float32)
                   + bias_ref[0:1, 0:ML])                          # (B, ML) f32

    m = jnp.max(attn_logits, axis=1, keepdims=True)
    e = jnp.exp(attn_logits - m)
    attn_w = e * pl.reciprocal(jnp.sum(e, axis=1, keepdims=True),
                               approx=True)                        # (B, ML)

    # ---- attn_applied = bmm(attn_w[:, None, :], encoder_outputs) on MXU ----
    attn_applied = jnp.einsum(
        "bqm,bmh->bqh",
        attn_w.astype(jnp.bfloat16).reshape(B, 1, ML),
        enc_ref[...].astype(jnp.bfloat16),
        preferred_element_type=jnp.float32).reshape(B, H)          # (B, H)

    # ---- attn_combine + relu: ONE push  [one_hot | attn_applied] @ [emb@Wc ; Wa] ----
    xc = jnp.concatenate([one_hot, attn_applied.astype(jnp.bfloat16)], axis=1)
    combined = (jnp.dot(xc, w_misc_ref[row_comb:row_comb + VH, 0:H],
                        preferred_element_type=jnp.float32)
                + bias_ref[1:2, 0:H])                              # (B, H)
    x = jnp.maximum(combined, 0.0)

    # ---- multi-layer LSTM: one (B,2H)@(2H,4H) push + ONE full-vreg tanh per layer ----
    for layer in range(L):
        h_prev = h_sc[layer]                                       # (B, H) f32
        c_prev = c_sc[layer]                                       # (B, H) f32
        xh = jnp.concatenate([x.astype(jnp.bfloat16),
                              h_prev.astype(jnp.bfloat16)], axis=1)  # (B, 2H)
        gates = (jnp.dot(xh, w_xh_ref[layer],
                         preferred_element_type=jnp.float32)
                 + bias_ref[3 + layer:4 + layer, 0:4 * H])         # (B, 4H) f32

        # i/f/o columns were pre-scaled by 0.5 at pack time:
        #   sigmoid(z) = 0.5*tanh(z/2) + 0.5  -> single tanh on the full vreg.
        tg = jnp.tanh(gates)
        i_g = 0.5 * tg[:, 0 * H:1 * H] + 0.5
        f_g = 0.5 * tg[:, 1 * H:2 * H] + 0.5
        g_g = tg[:, 2 * H:3 * H]
        o_g = 0.5 * tg[:, 3 * H:4 * H] + 0.5

        c_n = f_g * c_prev + i_g * g_g
        h_n = o_g * jnp.tanh(c_n)
        h_sc[layer] = h_n
        c_sc[layer] = c_n
        x = h_n                                                    # feed next layer

    # ---- output projection + log_softmax ----
    logits = (jnp.dot(x.astype(jnp.bfloat16),
                      w_misc_ref[row_out:row_out + H, 0:V],
                      preferred_element_type=jnp.float32)
              + bias_ref[2:3, 0:V])                                # (B, V)
    m2 = jnp.max(logits, axis=1, keepdims=True)
    z = logits - m2
    lse = jnp.log(jnp.sum(jnp.exp(z), axis=1, keepdims=True))
    logp_ref[0] = z - lse

    # ---- write the final recurrent state back once, at the last decode step ----
    @pl.when(t == pl.num_programs(0) - 1)
    def _():
        h_new_ref[...] = h_sc[...]
        c_new_ref[...] = c_sc[...]


# ------------------------- one-time parameter packing ------------------------
def pack_params(params):
    """Repack / pre-fold all weights ONCE at model-load time (not per token)."""
    V, H = params["emb"].shape
    ML = params["attn_w"].shape[0]
    L = params["lstm_w_ih"].shape[0]

    emb = params["emb"].astype(jnp.float32)
    attn_we = params["attn_w"][:, :H].T                    # (H, ML)
    attn_wh = params["attn_w"][:, H:].T                    # (H, ML)
    comb_we = params["comb_w"][:, :H].T                    # (H, H)
    comb_wa = params["comb_w"][:, H:].T                    # (H, H)

    # embedding folded into the attn / combine tables (contract over V, not H),
    # stacked on the contraction dim so [one_hot | other] needs ONE matmul each.
    w_attn = jnp.concatenate([emb @ attn_we, attn_wh], axis=0)   # (V+H, ML)
    w_comb = jnp.concatenate([emb @ comb_we, comb_wa], axis=0)   # (V+H, H)
    w_out = params["out_w"].T                                    # (H, V)

    lane_w = max(ML, H, V)

    def pad_block(a):
        rows = _round_up(a.shape[0], 8)
        return jnp.pad(a, ((0, rows - a.shape[0]), (0, lane_w - a.shape[1])))

    sec_attn, sec_comb, sec_out = pad_block(w_attn), pad_block(w_comb), pad_block(w_out)
    row_attn = 0
    row_comb = sec_attn.shape[0]
    row_out = row_comb + sec_comb.shape[0]
    # single bf16 table: attn | combine | out projection stacked along sublanes
    w_misc = jnp.concatenate([sec_attn, sec_comb, sec_out], axis=0).astype(jnp.bfloat16)

    # LSTM: [W_ih.T ; W_hh.T] per layer -> (L, 2H, 4H); i/f/o columns scaled by
    # 0.5 so the in-kernel activation is a single tanh (sigmoid identity).
    gate_scale = jnp.concatenate([jnp.full((H,), 0.5, jnp.float32),
                                  jnp.full((H,), 0.5, jnp.float32),
                                  jnp.ones((H,), jnp.float32),
                                  jnp.full((H,), 0.5, jnp.float32)])      # (4H,)
    w_xh = jnp.stack([jnp.concatenate([params["lstm_w_ih"][l].T,
                                       params["lstm_w_hh"][l].T], axis=0)
                      for l in range(L)])                                 # (L, 2H, 4H)
    w_xh = (w_xh * gate_scale[None, None, :]).astype(jnp.bfloat16)
    b_lstm = (params["lstm_b_ih"] + params["lstm_b_hh"]) * gate_scale[None, :]  # (L, 4H)

    # all f32 biases in ONE padded buffer: rows = [attn_b, comb_b, out_b, b_lstm[0..L-1]]
    bias_w = max(ML, H, V, 4 * H)

    def pad_vec(v):
        return jnp.pad(v, (0, bias_w - v.shape[0]))

    bias = jnp.stack([pad_vec(params["attn_b"]),
                      pad_vec(params["comb_b"]),
                      pad_vec(params["out_b"])]
                     + [pad_vec(b_lstm[l]) for l in range(L)]).astype(jnp.float32)

    packed = {"w_misc": w_misc, "w_xh": w_xh, "bias": bias}
    packed = jax.block_until_ready(packed)
    packed["meta"] = dict(V=int(V), H=int(H), ML=int(ML), L=int(L),
                          row_attn=int(row_attn), row_comb=int(row_comb),
                          row_out=int(row_out))
    return packed


# ------------------------------- wrappers ------------------------------------
def _decode_pallas(packed, ids_tb1, h0, c0, encoder_outputs):
    """Fused T-step decode in ONE pallas_call. ids_tb1: (T, B, 1) int32."""
    meta = packed["meta"]
    L, B, H = h0.shape
    V, ML = meta["V"], meta["ML"]
    T = ids_tb1.shape[0]

    kernel = functools.partial(_decoder_kernel, meta=meta)

    logp_seq, h_new, c_new = pl.pallas_call(
        kernel,
        out_shape=(jax.ShapeDtypeStruct((T, B, V), jnp.float32),
                   jax.ShapeDtypeStruct((L, B, H), jnp.float32),
                   jax.ShapeDtypeStruct((L, B, H), jnp.float32)),
        grid=(T,),
        in_specs=[
            pl.BlockSpec((1, B, 1), lambda t: (t, 0, 0)),              # token ids (per step)
            pl.BlockSpec((L, B, H), lambda t: (0, 0, 0)),              # h0  (fetched once)
            pl.BlockSpec((L, B, H), lambda t: (0, 0, 0)),              # c0  (fetched once)
            pl.BlockSpec(encoder_outputs.shape, lambda t: (0, 0, 0)),  # encoder outputs
            pl.BlockSpec(packed["w_misc"].shape, lambda t: (0, 0)),    # attn|comb|out weights
            pl.BlockSpec(packed["w_xh"].shape, lambda t: (0, 0, 0)),   # fused LSTM weights
            pl.BlockSpec(packed["bias"].shape, lambda t: (0, 0)),      # all biases
        ],
        out_specs=(
            pl.BlockSpec((1, B, V), lambda t: (t, 0, 0)),              # log-probs per step
            pl.BlockSpec((L, B, H), lambda t: (0, 0, 0)),              # final h
            pl.BlockSpec((L, B, H), lambda t: (0, 0, 0)),              # final c
        ),
        scratch_shapes=[pltpu.VMEM((L, B, H), jnp.float32),            # carried h state
                        pltpu.VMEM((L, B, H), jnp.float32)],           # carried c state
        input_output_aliases={1: 1, 2: 2},                             # h0->h_new, c0->c_new
        compiler_params=pltpu.CompilerParams(
            dimension_semantics=("arbitrary",)),
    )(ids_tb1, h0, c0, encoder_outputs,
      packed["w_misc"], packed["w_xh"], packed["bias"])
    return logp_seq, h_new, c_new


def seq_decoder_attention_lstm(packed, input_ids, hidden_cell, encoder_outputs):
    """Single-step forward (module semantics): T=1 case of the fused kernel."""
    h0, c0 = hidden_cell
    B = h0.shape[1]
    ids = input_ids.astype(jnp.int32).reshape(1, B, 1)
    logp_seq, h_new, c_new = _decode_pallas(packed, ids, h0, c0, encoder_outputs)
    return logp_seq[0], (h_new, c_new)


def seq_decoder_attention_lstm_seq(packed, input_ids_seq, hidden_cell, encoder_outputs):
    """Fused teacher-forced multi-step decode. input_ids_seq: (T, B) int32."""
    h0, c0 = hidden_cell
    T, B = input_ids_seq.shape
    ids = input_ids_seq.astype(jnp.int32).reshape(T, B, 1)
    logp_seq, h_new, c_new = _decode_pallas(packed, ids, h0, c0, encoder_outputs)
    return logp_seq, (h_new, c_new)


# --------------------------- pure-JAX reference -------------------------------
def reference_forward(params, input_ids, hidden_cell, encoder_outputs):
    h0, c0 = hidden_cell
    L, B, H = h0.shape
    embedded = params["emb"][input_ids]                        # (B, H)
    cat1 = jnp.concatenate([embedded, h0[0]], axis=1)          # (B, 2H)
    attn_logits = cat1 @ params["attn_w"].T + params["attn_b"]
    attn_w = jax.nn.softmax(attn_logits, axis=1)               # (B, ML)
    attn_applied = jnp.einsum("bm,bmh->bh", attn_w, encoder_outputs)
    cat2 = jnp.concatenate([embedded, attn_applied], axis=1)
    x = jax.nn.relu(cat2 @ params["comb_w"].T + params["comb_b"])
    h_new, c_new = [], []
    for l in range(L):
        gates = (x @ params["lstm_w_ih"][l].T + params["lstm_b_ih"][l]
                 + h0[l] @ params["lstm_w_hh"][l].T + params["lstm_b_hh"][l])
        i_g, f_g, g_g, o_g = jnp.split(gates, 4, axis=1)
        i_g, f_g, o_g = jax.nn.sigmoid(i_g), jax.nn.sigmoid(f_g), jax.nn.sigmoid(o_g)
        g_g = jnp.tanh(g_g)
        c_n = f_g * c0[l] + i_g * g_g
        h_n = o_g * jnp.tanh(c_n)
        h_new.append(h_n); c_new.append(c_n)
        x = h_n
    logits = x @ params["out_w"].T + params["out_b"]
    logp = jax.nn.log_softmax(logits, axis=1)
    return logp, (jnp.stack(h_new), jnp.stack(c_new))


# ---------------------------------- main --------------------------------------
if __name__ == "__main__":
    hidden_size = 32     # H
    output_size = 16     # vocab / output classes V
    batch_size = 2       # B
    max_length = 8       # ML
    num_layers = 2       # L
    seq_len = 4          # fused teacher-forced decode steps

    key = jax.random.PRNGKey(0)
    keys = jax.random.split(key, 16)

    def u(k, shape, scale=0.1):
        return (jax.random.uniform(k, shape, jnp.float32) * 2.0 - 1.0) * scale

    params = {
        "emb":     u(keys[0], (output_size, hidden_size), 1.0),
        "attn_w":  u(keys[1], (max_length, 2 * hidden_size)),
        "attn_b":  u(keys[2], (max_length,)),
        "comb_w":  u(keys[3], (hidden_size, 2 * hidden_size)),
        "comb_b":  u(keys[4], (hidden_size,)),
        "lstm_w_ih": jnp.stack([u(keys[5 + l], (4 * hidden_size, hidden_size))
                                for l in range(num_layers)]),
        "lstm_w_hh": jnp.stack([u(keys[7 + l], (4 * hidden_size, hidden_size))
                                for l in range(num_layers)]),
        "lstm_b_ih": jnp.stack([u(keys[9 + l], (4 * hidden_size,))
                                for l in range(num_layers)]),
        "lstm_b_hh": jnp.stack([u(keys[11 + l], (4 * hidden_size,))
                                for l in range(num_layers)]),
        "out_w":   u(keys[13], (output_size, hidden_size)),
        "out_b":   u(keys[14], (output_size,)),
    }

    dk = jax.random.split(keys[15], 5)
    input_ids = jax.random.randint(dk[0], (batch_size,), 0, output_size, jnp.int32)
    h0 = jax.random.uniform(dk[1], (num_layers, batch_size, hidden_size), jnp.float32)
    c0 = jax.random.uniform(dk[2], (num_layers, batch_size, hidden_size), jnp.float32)
    encoder_outputs = jax.random.uniform(
        dk[3], (batch_size, max_length, hidden_size), jnp.float32)
    ids_seq = jax.random.randint(dk[4], (seq_len, batch_size), 0, output_size, jnp.int32)

    # One-time weight packing (hoisted out of the per-token path).
    packed = pack_params(params)

    # ---- single-step forward (module semantics), T=1 grid ----
    logp, (h1, c1) = seq_decoder_attention_lstm(
        packed, input_ids, (h0, c0), encoder_outputs)
    jax.block_until_ready((logp, h1, c1))

    logp_r, (h_r, c_r) = reference_forward(params, input_ids, (h0, c0), encoder_outputs)
    assert jnp.allclose(logp, logp_r, atol=3e-2, rtol=3e-2), "logp mismatch"
    assert jnp.allclose(h1, h_r, atol=3e-2, rtol=3e-2), "h mismatch"
    assert jnp.allclose(c1, c_r, atol=3e-2, rtol=3e-2), "c mismatch"

    # ---- fused T-step teacher-forced decode: ONE pallas_call, VMEM-resident weights ----
    logp_seq, (hT, cT) = seq_decoder_attention_lstm_seq(
        packed, ids_seq, (h0, c0), encoder_outputs)
    jax.block_until_ready((logp_seq, hT, cT))

    h, c = h0, c0
    lp_steps = []
    for t in range(seq_len):
        lp_t, (h, c) = reference_forward(params, ids_seq[t], (h, c), encoder_outputs)
        lp_steps.append(lp_t)
    logp_seq_r = jnp.stack(lp_steps)
    assert jnp.allclose(logp_seq, logp_seq_r, atol=5e-2, rtol=5e-2), "seq logp mismatch"
    assert jnp.allclose(hT, h, atol=5e-2, rtol=5e-2), "seq h mismatch"
    assert jnp.allclose(cT, c, atol=5e-2, rtol=5e-2), "seq c mismatch"

    print("KERNEL_OK")
</pallas_src>

<mosaic_0001>
module attributes {stable_mosaic.version = 11 : i64} {
  func.func @_decoder_kernel(%arg0: i32, %arg1: memref<1x2x1xi32, #tpu.memory_space<vmem>>, %arg2: memref<2x2x32xf32, #tpu.memory_space<vmem>>, %arg3: memref<2x2x32xf32, #tpu.memory_space<vmem>>, %arg4: memref<2x8x32xf32, #tpu.memory_space<vmem>>, %arg5: memref<128x32xbf16, #tpu.memory_space<vmem>>, %arg6: memref<2x64x128xbf16, #tpu.memory_space<vmem>>, %arg7: memref<5x128xf32, #tpu.memory_space<vmem>>, %arg8: memref<1x2x16xf32, #tpu.memory_space<vmem>>, %arg9: memref<2x2x32xf32, #tpu.memory_space<vmem>>, %arg10: memref<2x2x32xf32, #tpu.memory_space<vmem>>, %arg11: memref<2x2x32xf32, #tpu.memory_space<vmem>>, %arg12: memref<2x2x32xf32, #tpu.memory_space<vmem>>) attributes {dimension_semantics = [#tpu.dimension_semantics<arbitrary>], iteration_bounds = array<i64: 1>, scalar_prefetch = 0 : i64, scratch_operands = 2 : i64, tpu.core_type = #tpu.core_type<tc>, window_params = [{transform_indices = @transform_0, window_bounds = array<i64: 1, 2, 1>}, {pipeline_mode = #tpu.pipeline_mode<synchronous>, transform_indices = @transform_1, window_bounds = array<i64: 2, 2, 32>}, {pipeline_mode = #tpu.pipeline_mode<synchronous>, transform_indices = @transform_2, window_bounds = array<i64: 2, 2, 32>}, {pipeline_mode = #tpu.pipeline_mode<synchronous>, transform_indices = @transform_3, window_bounds = array<i64: 2, 8, 32>}, {pipeline_mode = #tpu.pipeline_mode<synchronous>, transform_indices = @transform_4, window_bounds = array<i64: 128, 32>}, {pipeline_mode = #tpu.pipeline_mode<synchronous>, transform_indices = @transform_5, window_bounds = array<i64: 2, 64, 128>}, {pipeline_mode = #tpu.pipeline_mode<synchronous>, transform_indices = @transform_6, window_bounds = array<i64: 5, 128>}, {transform_indices = @transform_7, window_bounds = array<i64: 1, 2, 16>}, {pipeline_mode = #tpu.pipeline_mode<synchronous>, transform_indices = @transform_8, window_bounds = array<i64: 2, 2, 32>}, {pipeline_mode = #tpu.pipeline_mode<synchronous>, transform_indices = @transform_9, window_bounds = array<i64: 2, 2, 32>}]} {
    %c0_i32 = arith.constant 0 : i32
    %0 = arith.cmpi eq, %arg0, %c0_i32 : i32
    %1 = arith.extui %0 : i1 to i32
    %c0_i32_0 = arith.constant 0 : i32
    %2 = arith.cmpi ne, %1, %c0_i32_0 : i32
    scf.if %2 {
      %c0_76 = arith.constant 0 : index
      %c0_77 = arith.constant 0 : index
      %c0_78 = arith.constant 0 : index
      %149 = vector.load %arg2[%c0_76, %c0_77, %c0_78] : memref<2x2x32xf32, #tpu.memory_space<vmem>>, vector<2x2x32xf32>
      %c0_79 = arith.constant 0 : index
      %c0_80 = arith.constant 0 : index
      %c0_81 = arith.constant 0 : index
      %150 = vector.load %arg11[%c0_79, %c0_80, %c0_81] : memref<2x2x32xf32, #tpu.memory_space<vmem>>, vector<2x2x32xf32>
      tpu.vector_store %arg11[%c0_79, %c0_80, %c0_81], %149 {strides = array<i32>} : memref<2x2x32xf32, #tpu.memory_space<vmem>>, vector<2x2x32xf32>,
      %c0_82 = arith.constant 0 : index
      %c0_83 = arith.constant 0 : index
      %c0_84 = arith.constant 0 : index
      %151 = vector.load %arg3[%c0_82, %c0_83, %c0_84] : memref<2x2x32xf32, #tpu.memory_space<vmem>>, vector<2x2x32xf32>
      %c0_85 = arith.constant 0 : index
      %c0_86 = arith.constant 0 : index
      %c0_87 = arith.constant 0 : index
      %152 = vector.load %arg12[%c0_85, %c0_86, %c0_87] : memref<2x2x32xf32, #tpu.memory_space<vmem>>, vector<2x2x32xf32>
      tpu.vector_store %arg12[%c0_85, %c0_86, %c0_87], %151 {strides = array<i32>} : memref<2x2x32xf32, #tpu.memory_space<vmem>>, vector<2x2x32xf32>,
    } else {
    }
    %c0 = arith.constant 0 : index
    %c0_1 = arith.constant 0 : index
    %c0_2 = arith.constant 0 : index
    %3 = vector.load %arg1[%c0, %c0_1, %c0_2] : memref<1x2x1xi32, #tpu.memory_space<vmem>>, vector<1x2x1xi32>
    %4 = vector.shape_cast %3 : vector<1x2x1xi32> to vector<2x1xi32>
    %5 = tpu.iota {dimensions = array<i32: 1>} : vector<2x16xi32>
    %6 = vector.broadcast %4 : vector<2x1xi32> to vector<2x16xi32>
    %7 = arith.cmpi eq, %6, %5 : vector<2x16xi32>
    %8 = arith.extui %7 : vector<2x16xi1> to vector<2x16xi32>
    %9 = arith.sitofp %8 : vector<2x16xi32> to vector<2x16xf32>
    %10 = arith.truncf %9 : vector<2x16xf32> to vector<2x16xbf16>
    %c0_3 = arith.constant 0 : index
    %c0_4 = arith.constant 0 : index
    %c0_5 = arith.constant 0 : index
    %11 = vector.load %arg11[%c0_3, %c0_4, %c0_5] : memref<2x2x32xf32, #tpu.memory_space<vmem>>, vector<1x2x32xf32>
    %12 = vector.shape_cast %11 : vector<1x2x32xf32> to vector<2x32xf32>
    %13 = arith.truncf %12 : vector<2x32xf32> to vector<2x32xbf16>
    %14 = tpu.concatenate %10, %13 in 1 : vector<2x16xbf16>, vector<2x32xbf16> -> vector<2x48xbf16>
    %c0_6 = arith.constant 0 : index
    %c0_7 = arith.constant 0 : index
    %15 = vector.load %arg5[%c0_6, %c0_7] : memref<128x32xbf16, #tpu.memory_space<vmem>>, vector<48x8xbf16>
    %cst = arith.constant dense<0.000000e+00> : vector<2x8xf32>
    %16 = tpu.matmul %14, %15, %cst {dimension_numbers = #tpu.dot_dimension_numbers<[1], [0], [0], [1], [0, 0, 1, 1], [], []>} : vector<2x48xbf16>, vector<48x8xbf16>, vector<2x8xf32> -> vector<2x8xf32>
    %c0_8 = arith.constant 0 : index
    %c0_9 = arith.constant 0 : index
    %17 = vector.load %arg7[%c0_8, %c0_9] : memref<5x128xf32, #tpu.memory_space<vmem>>, vector<1x8xf32>
    %18 = vector.broadcast %17 : vector<1x8xf32> to vector<2x8xf32>
    %19 = arith.addf %16, %18 : vector<2x8xf32>
    %cst_10 = arith.constant dense<0xFF800000> : vector<2xf32>
    %20 = vector.multi_reduction <maximumf>, %19, %cst_10 [1] : vector<2x8xf32> to vector<2xf32>
    %21 = vector.shape_cast %20 : vector<2xf32> to vector<2x1xf32>
    %22 = vector.broadcast %21 : vector<2x1xf32> to vector<2x8xf32>
    %23 = arith.subf %19, %22 : vector<2x8xf32>
    %24 = math.exp %23 : vector<2x8xf32>
    %cst_11 = arith.constant dense<0.000000e+00> : vector<2xf32>
    %25 = vector.multi_reduction <add>, %24, %cst_11 [1] : vector<2x8xf32> to vector<2xf32>
    %26 = vector.shape_cast %25 : vector<2xf32> to vector<2x1xf32>
    %27 = tpu.reciprocal %26 {approx = true} : vector<2x1xf32> -> vector<2x1xf32>
    %28 = vector.broadcast %27 : vector<2x1xf32> to vector<2x8xf32>
    %29 = arith.mulf %24, %28 : vector<2x8xf32>
    %30 = arith.truncf %29 : vector<2x8xf32> to vector<2x8xbf16>
    %31 = vector.shape_cast %30 : vector<2x8xbf16> to vector<2x1x8xbf16>
    %c0_12 = arith.constant 0 : index
    %c0_13 = arith.constant 0 : index
    %c0_14 = arith.constant 0 : index
    %32 = vector.load %arg4[%c0_12, %c0_13, %c0_14] : memref<2x8x32xf32, #tpu.memory_space<vmem>>, vector<2x8x32xf32>
    %33 = arith.truncf %32 : vector<2x8x32xf32> to vector<2x8x32xbf16>
    "tpu.trace_start"() <{level = 10 : i32, message = "bqm,bmh->bqh"}> : () -> ()
    %cst_15 = arith.constant dense<0.000000e+00> : vector<2x1x32xf32>
    %34 = tpu.matmul %31, %33, %cst_15 {dimension_numbers = #tpu.dot_dimension_numbers<[2], [1], [1], [2], [0, 0, 0, 1, 1, 2], [0], [0]>} : vector<2x1x8xbf16>, vector<2x8x32xbf16>, vector<2x1x32xf32> -> vector<2x1x32xf32>
    "tpu.trace_stop"() : () -> ()
    %35 = vector.shape_cast %34 : vector<2x1x32xf32> to vector<2x32xf32>
    %36 = arith.truncf %35 : vector<2x32xf32> to vector<2x32xbf16>
    %37 = tpu.concatenate %10, %36 in 1 : vector<2x16xbf16>, vector<2x32xbf16> -> vector<2x48xbf16>
    %c48 = arith.constant 48 : index
    %c0_16 = arith.constant 0 : index
    %38 = vector.load %arg5[%c48, %c0_16] : memref<128x32xbf16, #tpu.memory_space<vmem>>, vector<48x32xbf16>
    %cst_17 = arith.constant dense<0.000000e+00> : vector<2x32xf32>
    %39 = tpu.matmul %37, %38, %cst_17 {dimension_numbers = #tpu.dot_dimension_numbers<[1], [0], [0], [1], [0, 0, 1, 1], [], []>} : vector<2x48xbf16>, vector<48x32xbf16>, vector<2x32xf32> -> vector<2x32xf32>
    %c1 = arith.constant 1 : index
    %c0_18 = arith.constant 0 : index
    %40 = vector.load %arg7[%c1, %c0_18] : memref<5x128xf32, #tpu.memory_space<vmem>>, vector<1x32xf32>
    %41 = vector.broadcast %40 : vector<1x32xf32> to vector<2x32xf32>
    %42 = arith.addf %39, %41 : vector<2x32xf32>
    %cst_19 = arith.constant 0.000000e+00 : f32
    %43 = vector.broadcast %cst_19 : f32 to vector<2x32xf32>
    %44 = arith.maximumf %42, %43 : vector<2x32xf32>
    %c0_20 = arith.constant 0 : index
    %c0_21 = arith.constant 0 : index
    %c0_22 = arith.constant 0 : index
    %45 = vector.load %arg11[%c0_20, %c0_21, %c0_22] : memref<2x2x32xf32, #tpu.memory_space<vmem>>, vector<1x2x32xf32>
    %46 = vector.shape_cast %45 : vector<1x2x32xf32> to vector<2x32xf32>
    %c0_23 = arith.constant 0 : index
    %c0_24 = arith.constant 0 : index
    %c0_25 = arith.constant 0 : index
    %47 = vector.load %arg12[%c0_23, %c0_24, %c0_25] : memref<2x2x32xf32, #tpu.memory_space<vmem>>, vector<1x2x32xf32>
    %48 = vector.shape_cast %47 : vector<1x2x32xf32> to vector<2x32xf32>
    %49 = arith.truncf %44 : vector<2x32xf32> to vector<2x32xbf16>
    %50 = arith.truncf %46 : vector<2x32xf32> to vector<2x32xbf16>
    %51 = tpu.concatenate %49, %50 in 1 : vector<2x32xbf16>, vector<2x32xbf16> -> vector<2x64xbf16>
    %c0_26 = arith.constant 0 : index
    %c0_27 = arith.constant 0 : index
    %c0_28 = arith.constant 0 : index
    %52 = vector.load %arg6[%c0_26, %c0_27, %c0_28] : memref<2x64x128xbf16, #tpu.memory_space<vmem>>, vector<1x64x128xbf16>
    %53 = vector.shape_cast %52 : vector<1x64x128xbf16> to vector<64x128xbf16>
    %cst_29 = arith.constant dense<0.000000e+00> : vector<2x128xf32>
    %54 = tpu.matmul %51, %53, %cst_29 {dimension_numbers = #tpu.dot_dimension_numbers<[1], [0], [0], [1], [0, 0, 1, 1], [], []>} : vector<2x64xbf16>, vector<64x128xbf16>, vector<2x128xf32> -> vector<2x128xf32>
    %c3 = arith.constant 3 : index
    %c0_30 = arith.constant 0 : index
    %55 = vector.load %arg7[%c3, %c0_30] : memref<5x128xf32, #tpu.memory_space<vmem>>, vector<1x128xf32>
    %56 = vector.broadcast %55 : vector<1x128xf32> to vector<2x128xf32>
    %57 = arith.addf %54, %56 : vector<2x128xf32>
    %58 = math.tanh %57 : vector<2x128xf32>
    %59 = vector.extract_strided_slice %58 {offsets = [0, 0], sizes = [2, 32], strides = [1, 1]} : vector<2x128xf32> to vector<2x32xf32>
    %cst_31 = arith.constant 5.000000e-01 : f32
    %60 = vector.broadcast %cst_31 : f32 to vector<2x32xf32>
    %61 = arith.mulf %60, %59 : vector<2x32xf32>
    %cst_32 = arith.constant 5.000000e-01 : f32
    %62 = vector.broadcast %cst_32 : f32 to vector<2x32xf32>
    %63 = arith.addf %61, %62 : vector<2x32xf32>
    %64 = vector.extract_strided_slice %58 {offsets = [0, 32], sizes = [2, 32], strides = [1, 1]} : vector<2x128xf32> to vector<2x32xf32>
    %cst_33 = arith.constant 5.000000e-01 : f32
    %65 = vector.broadcast %cst_33 : f32 to vector<2x32xf32>
    %66 = arith.mulf %65, %64 : vector<2x32xf32>
    %cst_34 = arith.constant 5.000000e-01 : f32
    %67 = vector.broadcast %cst_34 : f32 to vector<2x32xf32>
    %68 = arith.addf %66, %67 : vector<2x32xf32>
    %69 = vector.extract_strided_slice %58 {offsets = [0, 64], sizes = [2, 32], strides = [1, 1]} : vector<2x128xf32> to vector<2x32xf32>
    %70 = vector.extract_strided_slice %58 {offsets = [0, 96], sizes = [2, 32], strides = [1, 1]} : vector<2x128xf32> to vector<2x32xf32>
    %cst_35 = arith.constant 5.000000e-01 : f32
    %71 = vector.broadcast %cst_35 : f32 to vector<2x32xf32>
    %72 = arith.mulf %71, %70 : vector<2x32xf32>
    %cst_36 = arith.constant 5.000000e-01 : f32
    %73 = vector.broadcast %cst_36 : f32 to vector<2x32xf32>
    %74 = arith.addf %72, %73 : vector<2x32xf32>
    %75 = arith.mulf %68, %48 : vector<2x32xf32>
    %76 = arith.mulf %63, %69 : vector<2x32xf32>
    %77 = arith.addf %75, %76 : vector<2x32xf32>
    %78 = math.tanh %77 : vector<2x32xf32>
    %79 = arith.mulf %74, %78 : vector<2x32xf32>
    %c0_37 = arith.constant 0 : index
    %c0_38 = arith.constant 0 : index
    %c0_39 = arith.constant 0 : index
    %80 = vector.load %arg11[%c0_37, %c0_38, %c0_39] : memref<2x2x32xf32, #tpu.memory_space<vmem>>, vector<1x2x32xf32>
    %81 = vector.shape_cast %80 : vector<1x2x32xf32> to vector<2x32xf32>
    %82 = vector.shape_cast %79 : vector<2x32xf32> to vector<1x2x32xf32>
    tpu.vector_store %arg11[%c0_37, %c0_38, %c0_39], %82 {strides = array<i32>} : memref<2x2x32xf32, #tpu.memory_space<vmem>>, vector<1x2x32xf32>,
    %c0_40 = arith.constant 0 : index
    %c0_41 = arith.constant 0 : index
    %c0_42 = arith.constant 0 : index
    %83 = vector.load %arg12[%c0_40, %c0_41, %c0_42] : memref<2x2x32xf32, #tpu.memory_space<vmem>>, vector<1x2x32xf32>
    %84 = vector.shape_cast %83 : vector<1x2x32xf32> to vector<2x32xf32>
    %85 = vector.shape_cast %77 : vector<2x32xf32> to vector<1x2x32xf32>
    tpu.vector_store %arg12[%c0_40, %c0_41, %c0_42], %85 {strides = array<i32>} : memref<2x2x32xf32, #tpu.memory_space<vmem>>, vector<1x2x32xf32>,
    %c1_43 = arith.constant 1 : index
    %c0_44 = arith.constant 0 : index
    %c0_45 = arith.constant 0 : index
    %86 = vector.load %arg11[%c1_43, %c0_44, %c0_45] : memref<2x2x32xf32, #tpu.memory_space<vmem>>, vector<1x2x32xf32>
    %87 = vector.shape_cast %86 : vector<1x2x32xf32> to vector<2x32xf32>
    %c1_46 = arith.constant 1 : index
    %c0_47 = arith.constant 0 : index
    %c0_48 = arith.constant 0 : index
    %88 = vector.load %arg12[%c1_46, %c0_47, %c0_48] : memref<2x2x32xf32, #tpu.memory_space<vmem>>, vector<1x2x32xf32>
    %89 = vector.shape_cast %88 : vector<1x2x32xf32> to vector<2x32xf32>
    %90 = arith.truncf %79 : vector<2x32xf32> to vector<2x32xbf16>
    %91 = arith.truncf %87 : vector<2x32xf32> to vector<2x32xbf16>
    %92 = tpu.concatenate %90, %91 in 1 : vector<2x32xbf16>, vector<2x32xbf16> -> vector<2x64xbf16>
    %c1_49 = arith.constant 1 : index
    %c0_50 = arith.constant 0 : index
    %c0_51 = arith.constant 0 : index
    %93 = vector.load %arg6[%c1_49, %c0_50, %c0_51] : memref<2x64x128xbf16, #tpu.memory_space<vmem>>, vector<1x64x128xbf16>
    %94 = vector.shape_cast %93 : vector<1x64x128xbf16> to vector<64x128xbf16>
    %cst_52 = arith.constant dense<0.000000e+00> : vector<2x128xf32>
    %95 = tpu.matmul %92, %94, %cst_52 {dimension_numbers = #tpu.dot_dimension_numbers<[1], [0], [0], [1], [0, 0, 1, 1], [], []>} : vector<2x64xbf16>, vector<64x128xbf16>, vector<2x128xf32> -> vector<2x128xf32>
    %c4 = arith.constant 4 : index
    %c0_53 = arith.constant 0 : index
    %96 = vector.load %arg7[%c4, %c0_53] : memref<5x128xf32, #tpu.memory_space<vmem>>, vector<1x128xf32>
    %97 = vector.broadcast %96 : vector<1x128xf32> to vector<2x128xf32>
    %98 = arith.addf %95, %97 : vector<2x128xf32>
    %99 = math.tanh %98 : vector<2x128xf32>
    %100 = vector.extract_strided_slice %99 {offsets = [0, 0], sizes = [2, 32], strides = [1, 1]} : vector<2x128xf32> to vector<2x32xf32>
    %cst_54 = arith.constant 5.000000e-01 : f32
    %101 = vector.broadcast %cst_54 : f32 to vector<2x32xf32>
    %102 = arith.mulf %101, %100 : vector<2x32xf32>
    %cst_55 = arith.constant 5.000000e-01 : f32
    %103 = vector.broadcast %cst_55 : f32 to vector<2x32xf32>
    %104 = arith.addf %102, %103 : vector<2x32xf32>
    %105 = vector.extract_strided_slice %99 {offsets = [0, 32], sizes = [2, 32], strides = [1, 1]} : vector<2x128xf32> to vector<2x32xf32>
    %cst_56 = arith.constant 5.000000e-01 : f32
    %106 = vector.broadcast %cst_56 : f32 to vector<2x32xf32>
    %107 = arith.mulf %106, %105 : vector<2x32xf32>
    %cst_57 = arith.constant 5.000000e-01 : f32
    %108 = vector.broadcast %cst_57 : f32 to vector<2x32xf32>
    %109 = arith.addf %107, %108 : vector<2x32xf32>
    %110 = vector.extract_strided_slice %99 {offsets = [0, 64], sizes = [2, 32], strides = [1, 1]} : vector<2x128xf32> to vector<2x32xf32>
    %111 = vector.extract_strided_slice %99 {offsets = [0, 96], sizes = [2, 32], strides = [1, 1]} : vector<2x128xf32> to vector<2x32xf32>
    %cst_58 = arith.constant 5.000000e-01 : f32
    %112 = vector.broadcast %cst_58 : f32 to vector<2x32xf32>
    %113 = arith.mulf %112, %111 : vector<2x32xf32>
    %cst_59 = arith.constant 5.000000e-01 : f32
    %114 = vector.broadcast %cst_59 : f32 to vector<2x32xf32>
    %115 = arith.addf %113, %114 : vector<2x32xf32>
    %116 = arith.mulf %109, %89 : vector<2x32xf32>
    %117 = arith.mulf %104, %110 : vector<2x32xf32>
    %118 = arith.addf %116, %117 : vector<2x32xf32>
    %119 = math.tanh %118 : vector<2x32xf32>
    %120 = arith.mulf %115, %119 : vector<2x32xf32>
    %c1_60 = arith.constant 1 : index
    %c0_61 = arith.constant 0 : index
    %c0_62 = arith.constant 0 : index
    %121 = vector.load %arg11[%c1_60, %c0_61, %c0_62] : memref<2x2x32xf32, #tpu.memory_space<vmem>>, vector<1x2x32xf32>
    %122 = vector.shape_cast %121 : vector<1x2x32xf32> to vector<2x32xf32>
    %123 = vector.shape_cast %120 : vector<2x32xf32> to vector<1x2x32xf32>
    tpu.vector_store %arg11[%c1_60, %c0_61, %c0_62], %123 {strides = array<i32>} : memref<2x2x32xf32, #tpu.memory_space<vmem>>, vector<1x2x32xf32>,
    %c1_63 = arith.constant 1 : index
    %c0_64 = arith.constant 0 : index
    %c0_65 = arith.constant 0 : index
    %124 = vector.load %arg12[%c1_63, %c0_64, %c0_65] : memref<2x2x32xf32, #tpu.memory_space<vmem>>, vector<1x2x32xf32>
    %125 = vector.shape_cast %124 : vector<1x2x32xf32> to vector<2x32xf32>
    %126 = vector.shape_cast %118 : vector<2x32xf32> to vector<1x2x32xf32>
    tpu.vector_store %arg12[%c1_63, %c0_64, %c0_65], %126 {strides = array<i32>} : memref<2x2x32xf32, #tpu.memory_space<vmem>>, vector<1x2x32xf32>,
    %127 = arith.truncf %120 : vector<2x32xf32> to vector<2x32xbf16>
    %c96 = arith.constant 96 : index
    %c0_66 = arith.constant 0 : index
    %128 = vector.load %arg5[%c96, %c0_66] : memref<128x32xbf16, #tpu.memory_space<vmem>>, vector<32x16xbf16>
    %cst_67 = arith.constant dense<0.000000e+00> : vector<2x16xf32>
    %129 = tpu.matmul %127, %128, %cst_67 {dimension_numbers = #tpu.dot_dimension_numbers<[1], [0], [0], [1], [0, 0, 1, 1], [], []>} : vector<2x32xbf16>, vector<32x16xbf16>, vector<2x16xf32> -> vector<2x16xf32>
    %c2 = arith.constant 2 : index
    %c0_68 = arith.constant 0 : index
    %130 = vector.load %arg7[%c2, %c0_68] : memref<5x128xf32, #tpu.memory_space<vmem>>, vector<1x16xf32>
    %131 = vector.broadcast %130 : vector<1x16xf32> to vector<2x16xf32>
    %132 = arith.addf %129, %131 : vector<2x16xf32>
    %cst_69 = arith.constant dense<0xFF800000> : vector<2xf32>
    %133 = vector.multi_reduction <maximumf>, %132, %cst_69 [1] : vector<2x16xf32> to vector<2xf32>
    %134 = vector.shape_cast %133 : vector<2xf32> to vector<2x1xf32>
    %135 = vector.broadcast %134 : vector<2x1xf32> to vector<2x16xf32>
    %136 = arith.subf %132, %135 : vector<2x16xf32>
    %137 = math.exp %136 : vector<2x16xf32>
    %cst_70 = arith.constant dense<0.000000e+00> : vector<2xf32>
    %138 = vector.multi_reduction <add>, %137, %cst_70 [1] : vector<2x16xf32> to vector<2xf32>
    %139 = vector.shape_cast %138 : vector<2xf32> to vector<2x1xf32>
    %140 = math.log %139 : vector<2x1xf32>
    %141 = vector.broadcast %140 : vector<2x1xf32> to vector<2x16xf32>
    %142 = arith.subf %136, %141 : vector<2x16xf32>
    %c0_71 = arith.constant 0 : index
    %c0_72 = arith.constant 0 : index
    %c0_73 = arith.constant 0 : index
    %143 = vector.load %arg8[%c0_71, %c0_72, %c0_73] : memref<1x2x16xf32, #tpu.memory_space<vmem>>, vector<1x2x16xf32>
    %144 = vector.shape_cast %143 : vector<1x2x16xf32> to vector<2x16xf32>
    %145 = vector.shape_cast %142 : vector<2x16xf32> to vector<1x2x16xf32>
    tpu.vector_store %arg8[%c0_71, %c0_72, %c0_73], %145 {strides = array<i32>} : memref<1x2x16xf32, #tpu.memory_space<vmem>>, vector<1x2x16xf32>,
    %c0_i32_74 = arith.constant 0 : i32
    %146 = arith.cmpi eq, %arg0, %c0_i32_74 : i32
    %147 = arith.extui %146 : i1 to i32
    %c0_i32_75 = arith.constant 0 : i32
    %148 = arith.cmpi ne, %147, %c0_i32_75 : i32
    scf.if %148 {
      %c0_76 = arith.constant 0 : index
      %c0_77 = arith.constant 0 : index
      %c0_78 = arith.constant 0 : index
      %149 = vector.load %arg11[%c0_76, %c0_77, %c0_78] : memref<2x2x32xf32, #tpu.memory_space<vmem>>, vector<2x2x32xf32>
      %c0_79 = arith.constant 0 : index
      %c0_80 = arith.constant 0 : index
      %c0_81 = arith.constant 0 : index
      %150 = vector.load %arg9[%c0_79, %c0_80, %c0_81] : memref<2x2x32xf32, #tpu.memory_space<vmem>>, vector<2x2x32xf32>
      tpu.vector_store %arg9[%c0_79, %c0_80, %c0_81], %149 {strides = array<i32>} : memref<2x2x32xf32, #tpu.memory_space<vmem>>, vector<2x2x32xf32>,
      %c0_82 = arith.constant 0 : index
      %c0_83 = arith.constant 0 : index
      %c0_84 = arith.constant 0 : index
      %151 = vector.load %arg12[%c0_82, %c0_83, %c0_84] : memref<2x2x32xf32, #tpu.memory_space<vmem>>, vector<2x2x32xf32>
      %c0_85 = arith.constant 0 : index
      %c0_86 = arith.constant 0 : index
      %c0_87 = arith.constant 0 : index
      %152 = vector.load %arg10[%c0_85, %c0_86, %c0_87] : memref<2x2x32xf32, #tpu.memory_space<vmem>>, vector<2x2x32xf32>
      tpu.vector_store %arg10[%c0_85, %c0_86, %c0_87], %151 {strides = array<i32>} : memref<2x2x32xf32, #tpu.memory_space<vmem>>, vector<2x2x32xf32>,
    } else {
    }
    return
  }
  func.func @transform_0(%arg0: i32) -> (i32, i32, i32) {
    %c0_i32 = arith.constant 0 : i32
    %c0_i32_0 = arith.constant 0 : i32
    %c0_i32_1 = arith.constant 0 : i32
    return %arg0, %c0_i32, %c0_i32_0 : i32, i32, i32
  }
  func.func @transform_1(%arg0: i32) -> (i32, i32, i32) {
    %c0_i32 = arith.constant 0 : i32
    %c0_i32_0 = arith.constant 0 : i32
    %c0_i32_1 = arith.constant 0 : i32
    %c0_i32_2 = arith.constant 0 : i32
    return %c0_i32, %c0_i32_0, %c0_i32_1 : i32, i32, i32
  }
  func.func @transform_2(%arg0: i32) -> (i32, i32, i32) {
    %c0_i32 = arith.constant 0 : i32
    %c0_i32_0 = arith.constant 0 : i32
    %c0_i32_1 = arith.constant 0 : i32
    %c0_i32_2 = arith.constant 0 : i32
    return %c0_i32, %c0_i32_0, %c0_i32_1 : i32, i32, i32
  }
  func.func @transform_3(%arg0: i32) -> (i32, i32, i32) {
    %c0_i32 = arith.constant 0 : i32
    %c0_i32_0 = arith.constant 0 : i32
    %c0_i32_1 = arith.constant 0 : i32
    %c0_i32_2 = arith.constant 0 : i32
    return %c0_i32, %c0_i32_0, %c0_i32_1 : i32, i32, i32
  }
  func.func @transform_4(%arg0: i32) -> (i32, i32) {
    %c0_i32 = arith.constant 0 : i32
    %c0_i32_0 = arith.constant 0 : i32
    %c0_i32_1 = arith.constant 0 : i32
    return %c0_i32, %c0_i32_0 : i32, i32
  }
  func.func @transform_5(%arg0: i32) -> (i32, i32, i32) {
    %c0_i32 = arith.constant 0 : i32
    %c0_i32_0 = arith.constant 0 : i32
    %c0_i32_1 = arith.constant 0 : i32
    %c0_i32_2 = arith.constant 0 : i32
    return %c0_i32, %c0_i32_0, %c0_i32_1 : i32, i32, i32
  }
  func.func @transform_6(%arg0: i32) -> (i32, i32) {
    %c0_i32 = arith.constant 0 : i32
    %c0_i32_0 = arith.constant 0 : i32
    %c0_i32_1 = arith.constant 0 : i32
    return %c0_i32, %c0_i32_0 : i32, i32
  }
  func.func @transform_7(%arg0: i32) -> (i32, i32, i32) {
    %c0_i32 = arith.constant 0 : i32
    %c0_i32_0 = arith.constant 0 : i32
    %c0_i32_1 = arith.constant 0 : i32
    return %arg0, %c0_i32, %c0_i32_0 : i32, i32, i32
  }
  func.func @transform_8(%arg0: i32) -> (i32, i32, i32) {
    %c0_i32 = arith.constant 0 : i32
    %c0_i32_0 = arith.constant 0 : i32
    %c0_i32_1 = arith.constant 0 : i32
    %c0_i32_2 = arith.constant 0 : i32
    return %c0_i32, %c0_i32_0, %c0_i32_1 : i32, i32, i32
  }
  func.func @transform_9(%arg0: i32) -> (i32, i32, i32) {
    %c0_i32 = arith.constant 0 : i32
    %c0_i32_0 = arith.constant 0 : i32
    %c0_i32_1 = arith.constant 0 : i32
    %c0_i32_2 = arith.constant 0 : i32
    return %c0_i32, %c0_i32_0, %c0_i32_1 : i32, i32, i32
  }
}

</mosaic_0001>

<llo_original>
// kernel: tpu_custom_call.1
$region0: #{tpu_custom_call.1}
  #allocation0 [shape = 'u32[]', space=smem, size = 0x4, offset = 0x4, fixed_abs, tag = 'smem constant byte address 0x4 - core index']
  #allocation1 [shape = 'u32[72,128]{1,0:T(1,128)}', space=vmem, size = 0x9000, scoped, tag = 'internal scratch']
  #allocation2 [shape = 'f32[2,2,32]{2,1,0:T(2,128)}', space=vmem, size = 0x800, scoped, tag = 'scratch operand']
  #allocation3 [shape = 'f32[2,2,32]{2,1,0:T(2,128)}', space=vmem, size = 0x800, scoped, tag = 'scratch operand']
  %s0 = inlined_call_operand.vmem [shape: s32[1,2,1], index: 0, kind: input, shape index: {}]
  %s1 = inlined_call_operand.hbm [shape: f32[2,2,32], index: 1, kind: input, shape index: {}, may-alias: {1,8}]
  %s2 = inlined_call_operand.hbm [shape: f32[2,2,32], index: 2, kind: input, shape index: {}, may-alias: {2,9}]
  %s3 = inlined_call_operand.vmem [shape: f32[2,8,32], index: 3, kind: input, shape index: {}]
  %s4 = inlined_call_operand.vmem [shape: bf16[128,32], index: 4, kind: input, shape index: {}]
  %s5 = inlined_call_operand.vmem [shape: bf16[2,64,128], index: 5, kind: input, shape index: {}]
  %s6 = inlined_call_operand.hbm [shape: f32[5,128], index: 6, kind: input, shape index: {}]
  %s7 = inlined_call_operand.hbm [shape: f32[1,2,16], index: 7, kind: output, shape index: {0}]
  %s8 = inlined_call_operand.hbm [shape: f32[2,2,32], index: 8, kind: output, shape index: {1}, may-alias: {1,8}]
  %s9 = inlined_call_operand.hbm [shape: f32[2,2,32], index: 9, kind: output, shape index: {2}, may-alias: {2,9}]
  %10 = xla_tuple %s7, %s8, %s9
  %s11 = sld [smem:[#allocation0]]
  $region74: #{tpu_custom_call.1} parent=0
    _
  %s13 = ssub.s32 1, %s11
  %s14 = scalar_select 0, %s13, %s11
  $region1: #{tpu_custom_call.1} parent=0
    #allocation4 [shape = 'u8[2048]{0}', space=vmem, size = 0x800, scoped, tag = 'input window, operand 1, single buffered']
    #allocation5 [shape = 's32[1]{0}', space=sflag, size = 0x4, scoped, tag = 'scoped memory for tpu_custom_call.1']
    #allocation6 [shape = 's32[1]{0}', space=sflag, size = 0x4, scoped, tag = 'scoped memory for tpu_custom_call.1']
    #allocation7 [shape = 'u8[2048]{0}', space=vmem, size = 0x800, scoped, tag = 'input window, operand 2, single buffered']
    #allocation8 [shape = 's32[1]{0}', space=sflag, size = 0x4, scoped, tag = 'scoped memory for tpu_custom_call.1']
    #allocation9 [shape = 'u8[4096]{0}', space=vmem, size = 0x1000, scoped, tag = 'input window, operand 6, single buffered']
    #allocation10 [shape = 'u8[1024]{0}', space=vmem, size = 0x400, scoped, tag = 'output window, operand 0, single buffered']
    #allocation11 [shape = 'u8[2048]{0}', space=vmem, size = 0x800, scoped, tag = 'output window, operand 1, single buffered']
    #allocation12 [shape = 's32[1]{0}', space=sflag, size = 0x4, scoped, tag = 'scoped memory for tpu_custom_call.1']
    #allocation13 [shape = 'u8[2048]{0}', space=vmem, size = 0x800, scoped, tag = 'output window, operand 2, single buffered']
    %15 = vsyncpa [#allocation5], 0
    %16 = vsyncpa [#allocation8], 0
    %17 = vsyncpa [#allocation6], 0
    %18 = vsyncpa [#allocation12], 0
    // Predicated region
    $region2: #{tpu_custom_call.1} parent=1 // pred_check
      _
    $region3: #{tpu_custom_call.1} parent=1 // pred_check_branch
      %20 = sbr.rel (0) target = $region5
    $region4: #{tpu_custom_call.1} parent=1 // pred_region
      _
    $region5: #{tpu_custom_call.1} parent=1 // pred_fallthru
      _
    // Predicated region
    $region6: #{tpu_custom_call.1} parent=1 // pred_check
      _
    $region7: #{tpu_custom_call.1} parent=1 // pred_check_branch
      %22 = sbr.rel (0) target = $region9
    $region8: #{tpu_custom_call.1} parent=1 // pred_region
      %24 = vsyncadd [#allocation5], 0
      %s25 = sshll.u32 %s1, 4
      %s26 = int_to_ptr.hbm [resolvable:$true] %s25
      %s27 = sshll.u32 [#allocation4], 4
      %s28 = int_to_ptr.vmem [resolvable:$true] %s27
      %33 = dma.hbm_to_vmem [thread:$0]  %s26, 64, %s28, [#allocation5], 32, 32, 2
    $region9: #{tpu_custom_call.1} parent=1 // pred_fallthru
      _
    // Predicated region
    $region10: #{tpu_custom_call.1} parent=1 // pred_check
      _
    $region11: #{tpu_custom_call.1} parent=1 // pred_check_branch
      %35 = sbr.rel (0) target = $region13
    $region12: #{tpu_custom_call.1} parent=1 // pred_region
      %37 = vsyncadd [#allocation8], 0
      %s38 = sshll.u32 %s2, 4
      %s39 = int_to_ptr.hbm [resolvable:$true] %s38
      %s40 = sshll.u32 [#allocation7], 4
      %s41 = int_to_ptr.vmem [resolvable:$true] %s40
      %46 = dma.hbm_to_vmem [thread:$0]  %s39, 64, %s41, [#allocation8], 32, 32, 2
    $region13: #{tpu_custom_call.1} parent=1 // pred_fallthru
      _
    // Predicated region
    $region14: #{tpu_custom_call.1} parent=1 // pred_check
      _
    $region15: #{tpu_custom_call.1} parent=1 // pred_check_branch
      %48 = sbr.rel (0) target = $region17
    $region16: #{tpu_custom_call.1} parent=1 // pred_region
      _
    $region17: #{tpu_custom_call.1} parent=1 // pred_fallthru
      _
    // Predicated region
    $region18: #{tpu_custom_call.1} parent=1 // pred_check
      _
    $region19: #{tpu_custom_call.1} parent=1 // pred_check_branch
      %50 = sbr.rel (0) target = $region21
    $region20: #{tpu_custom_call.1} parent=1 // pred_region
      _
    $region21: #{tpu_custom_call.1} parent=1 // pred_fallthru
      _
    // Predicated region
    $region22: #{tpu_custom_call.1} parent=1 // pred_check
      _
    $region23: #{tpu_custom_call.1} parent=1 // pred_check_branch
      %52 = sbr.rel (0) target = $region25
    $region24: #{tpu_custom_call.1} parent=1 // pred_region
      _
    $region25: #{tpu_custom_call.1} parent=1 // pred_fallthru
      _
    // Predicated region
    $region26: #{tpu_custom_call.1} parent=1 // pred_check
      _
    $region27: #{tpu_custom_call.1} parent=1 // pred_check_branch
      %54 = sbr.rel (0) target = $region29
    $region28: #{tpu_custom_call.1} parent=1 // pred_region
      %56 = vsyncadd [#allocation8], 0
      %s58 = sshll.u32 %s6, 4
      %s59 = int_to_ptr.hbm [resolvable:$true] %s58
      %s60 = sshll.u32 [#allocation9], 4
      %s61 = int_to_ptr.vmem [resolvable:$true] %s60
      %63 = dma.hbm_to_vmem [thread:$0]  %s59, 128, %s61, [#allocation8]
    $region29: #{tpu_custom_call.1} parent=1 // pred_fallthru
      _
    // Predicated region
    $region30: #{tpu_custom_call.1} parent=1 // pred_check
      _
    $region31: #{tpu_custom_call.1} parent=1 // pred_check_branch
      %65 = sbr.rel (0) target = $region33
    $region32: #{tpu_custom_call.1} parent=1 // pred_region
      %67 = dma.done [#allocation5], 64
    $region33: #{tpu_custom_call.1} parent=1 // pred_fallthru
      _
    // Predicated region
    $region34: #{tpu_custom_call.1} parent=1 // pred_check
      _
    $region35: #{tpu_custom_call.1} parent=1 // pred_check_branch
      %69 = sbr.rel (0) target = $region37
    $region36: #{tpu_custom_call.1} parent=1 // pred_region
      %71 = dma.done [#allocation8], 64
    $region37: #{tpu_custom_call.1} parent=1 // pred_fallthru
      _
    // Predicated region
    $region38: #{tpu_custom_call.1} parent=1 // pred_check
      _
    $region39: #{tpu_custom_call.1} parent=1 // pred_check_branch
      %73 = sbr.rel (0) target = $region41
    $region40: #{tpu_custom_call.1} parent=1 // pred_region
      %75 = dma.done [#allocation8], 128
    $region41: #{tpu_custom_call.1} parent=1 // pred_fallthru
      _
    %p77 = scmp.eq.s32.totalorder 0, 0
    // Predicated region
    $region42: #{tpu_custom_call.1} parent=1 // pred_check
      %p78 = pneg %p77
    $region43: #{tpu_custom_call.1} parent=1 // pred_check_branch
      %80 = sbr.rel (%p78) target = $region45
    $region44: #{tpu_custom_call.1} parent=1 // pred_region
      %v81 = vld [vmem:[#allocation4] sm:$0x3]
      %v82 = vld [vmem:[#allocation4 + $0x2] sm:$0x3]
      %vm83 = vcmask 254976
      %84 = vst.msk [vmem:[#allocation2] sm:$0x3] %vm83, %v81
      %85 = vst.msk [vmem:[#allocation2 + $0x2] sm:$0x3] %vm83, %v82
      %v86 = vld [vmem:[#allocation7] sm:$0x3]
      %v87 = vld [vmem:[#allocation7 + $0x2] sm:$0x3]
      %88 = vst.msk [vmem:[#allocation3] sm:$0x3] %vm83, %v86
      %89 = vst.msk [vmem:[#allocation3 + $0x2] sm:$0x3] %vm83, %v87
    $region45: #{tpu_custom_call.1} parent=1 // pred_fallthru
      _
    %v90 = vld [vmem:[%s0] sm:$0x3]
    %v91 = vlaneseq
    %v92 = vand.u32 %v91, 127
    %93 = vset.pattern.permute.xlu0 0
    %94 = vperm.xlu0 %93, %v90
    %v95 = vpop.permute.xlu0 %94
    %vm96 = vcmp.eq.s32.totalorder %v95, %v92
    %v97 = vsel %vm96, 1, 0
    %v98 = vcvt.s32.f32 %v97
    %v99 = vpack.c.bf16 %v98, %v98
    %v100 = vld [vmem:[#allocation2] sm:$0x3]
    %v101 = vpack.c.bf16 %v100, %v100
    %v103 = vunpack.c.l.b16 %v101
    %v104 = vpack.c.b16 %v103, %v103
    %105 = vrot.lane.b32.xlu0 %v104, 16
    %v106 = vpop.permute.xlu0 %105
    %vm107 = vcmask 130048
    %v110 = vsel %vm107, %v99, %v106
    %v111 = vld [vmem:[%s4] sm:$0xf]
    %v112 = vld [vmem:[%s4 + $0x4] sm:$0xf]
    %v113 = vld [vmem:[%s4 + $0x8] sm:$0xf]
    %v114 = vld [vmem:[%s4 + $0xc] sm:$0xf]
    %v115 = vld [vmem:[%s4 + $0x10] sm:$0xf]
    %v116 = vld [vmem:[%s4 + $0x14] sm:$0xf]
    %v117 = vld [vmem:[#allocation9] sm:$0x1]
    %v118 = vperm.slane %v117, 0
    %v125 = vunpack.c.l.b16 %v111
    %v126 = vunpack.c.l.b16 %v112
    %v127 = vunpack.c.l.b16 %v113
    %v128 = vunpack.c.l.b16 %v114
    %v129 = vunpack.c.l.b16 %v115
    %v130 = vunpack.c.l.b16 %v116
    %v131 = vpack.c.b16 %v126, %v125
    %v132 = vpack.c.b16 %v128, %v127
    %v133 = vpack.c.b16 %v130, %v129
    %vm137 = vcmask 392192
    %v138 = vsel %vm137, %v110, 0
    %140 = vmatpush.bf16.msra.mxu0 0
    %141 = vmatpush.bf16.msra.mxu0 0
    %142 = vmatpush.bf16.msra.mxu0 0
    %143 = vmatpush.bf16.msra.mxu0 0
    %144 = vmatpush.bf16.msra.mxu0 0
    %145 = vmatpush.bf16.msra.mxu0 %v133
    %146 = vmatpush.bf16.msra.mxu0 %v132
    %147 = vmatpush.bf16.msra.mxu0 %v131
    %148 = vmatmul.bf16.gmra.mxu0 %v138
    %v149 = vpop.f32.mrf.mxu0
    %v150 = vadd.f32 %v118, %v149
    %v151 = vpop.f32.mrf.mxu0
    %152 = vdwg.mxu0
    %vm153 = vcmask 58368
    %v154 = vsel %vm153, %v150, -inf
    %155 = vmax.xlane.f32.xlu0 %v154
    %v156 = vpop.xlane.xlu0 %155
    %v157 = vsub.f32 %v150, %v156
    %v158 = vmul.f32 %v157, 1.442695
    %v159 = vpow.pop %v158
    %v160 = vsel %vm153, %v159, 0.0
    %161 = vadd.xlane.f32.xlu0 %v160
    %v162 = vpop.xlane.xlu0 %161
    %v163 = vrcp.pop %v162
    %v164 = vmul.f32 %v159, %v163
    %v165 = vpack.c.bf16 %v164, %v164
    %v167 = vrot.slane %v165, 3
    %vm168 = vcmask 1040384
    %v171 = vsel %vm168, %v165, %v167
    %v173 = vunpack.i.l.s16 %v171
    %v174 = vunpack.i.h.s16 %v171
    %v175 = vld [vmem:[%s3] sm:$0xff]
    %v176 = vld [vmem:[%s3 + $0x8] sm:$0xff]
    %v177 = vpack.c.bf16 %v175, %v175
    %v178 = vpack.c.bf16 %v176, %v176
    %v179 = vpack.i.b16 %v173, %v173
    %v180 = vperm.slane %v179, 0
    %vm181 = vcmask 64512
    %v183 = vsel %vm181, %v180, 0
    %vm185 = vcmask 1043456
    %v187 = vsel %vm185, %v177, 0
    %189 = vmatpush.bf16.msra.mxu0 0
    %190 = vmatpush.bf16.msra.mxu0 0
    %191 = vmatpush.bf16.msra.mxu0 0
    %192 = vmatpush.bf16.msra.mxu0 0
    %193 = vmatpush.bf16.msra.mxu0 0
    %194 = vmatpush.bf16.msra.mxu0 0
    %195 = vmatpush.bf16.msra.mxu0 0
    %196 = vmatpush.bf16.msra.mxu0 %v187
    %197 = vmatmul.bf16.gmra.mxu0 %v183
    %v198 = vpop.f32.mrf.mxu0
    %v199 = vadd.f32 0.0, %v198
    %v200 = vpop.f32.mrf.mxu0
    %201 = vdwg.mxu0
    %v202 = vpack.i.b16 %v174, %v174
    %v203 = vperm.slane %v202, 0
    %v205 = vsel %vm181, %v203, 0
    %v208 = vsel %vm185, %v178, 0
    %210 = vmatpush.bf16.msra.mxu0 0
    %211 = vmatpush.bf16.msra.mxu0 0
    %212 = vmatpush.bf16.msra.mxu0 0
    %213 = vmatpush.bf16.msra.mxu0 0
    %214 = vmatpush.bf16.msra.mxu0 0
    %215 = vmatpush.bf16.msra.mxu0 0
    %216 = vmatpush.bf16.msra.mxu0 0
    %217 = vmatpush.bf16.msra.mxu0 %v208
    %218 = vmatmul.bf16.gmra.mxu0 %v205
    %v219 = vpop.f32.mrf.mxu0
    %v220 = vadd.f32 0.0, %v219
    %v221 = vpop.f32.mrf.mxu0
    %222 = vdwg.mxu0
    %v223 = vpack.c.bf16 %v199, %v199
    %v224 = vpack.c.bf16 %v220, %v220
    %v227 = vunpack.c.l.b16 %v223
    %v228 = vunpack.c.l.b16 %v224
    %v229 = vpack.c.b16 %v227, %v227
    %v230 = vpack.c.b16 %v228, %v228
    %v231 = vunpack.c.l.b16 %v229
    %v232 = vunpack.c.l.b16 %v230
    %v233 = vrot.slane %v232, 7
    %vm234 = vcmask 1041409
    %v235 = vsel %vm234, %v233, %v231
    %v236 = vpack.c.b16 %v235, %v235
    %237 = vrot.lane.b32.xlu0 %v236, 16
    %v238 = vpop.permute.xlu0 %237
    %v240 = vsel %vm107, %v99, %v238
    %v241 = vld [vmem:[%s4 + $0x18] sm:$0xf]
    %v242 = vld [vmem:[%s4 + $0x1c] sm:$0xf]
    %v243 = vld [vmem:[%s4 + $0x20] sm:$0xf]
    %v244 = vld [vmem:[%s4 + $0x24] sm:$0xf]
    %v245 = vld [vmem:[%s4 + $0x28] sm:$0xf]
    %v246 = vld [vmem:[%s4 + $0x2c] sm:$0xf]
    %v247 = vld [vmem:[#allocation9 + $0x1] sm:$0x1]
    %v248 = vperm.slane %v247, 0
    %v255 = vunpack.c.l.b16 %v241
    %v256 = vunpack.c.l.b16 %v242
    %v257 = vunpack.c.l.b16 %v243
    %v258 = vunpack.c.l.b16 %v244
    %v259 = vunpack.c.l.b16 %v245
    %v260 = vunpack.c.l.b16 %v246
    %v261 = vpack.c.b16 %v256, %v255
    %v262 = vpack.c.b16 %v258, %v257
    %v263 = vpack.c.b16 %v260, %v259
    %v267 = vsel %vm137, %v240, 0
    %269 = vmatpush.bf16.msra.mxu0 0
    %270 = vmatpush.bf16.msra.mxu0 0
    %271 = vmatpush.bf16.msra.mxu0 0
    %272 = vmatpush.bf16.msra.mxu0 0
    %273 = vmatpush.bf16.msra.mxu0 0
    %274 = vmatpush.bf16.msra.mxu0 %v263
    %275 = vmatpush.bf16.msra.mxu0 %v262
    %276 = vmatpush.bf16.msra.mxu0 %v261
    %277 = vmatmul.bf16.gmra.mxu0 %v267
    %v278 = vpop.f32.mrf.mxu0
    %v279 = vadd.f32 %v248, %v278
    %v280 = vpop.f32.mrf.mxu0
    %281 = vdwg.mxu0
    %v282 = vmax.f32 %v279, 0.0
    %v283 = vld [vmem:[#allocation2] sm:$0x3]
    %v284 = vld [vmem:[#allocation3] sm:$0x3]
    %v285 = vpack.c.bf16 %v282, %v282
    %v286 = vpack.c.bf16 %v283, %v283
    %v288 = vunpack.c.l.b16 %v286
    %v289 = vpack.c.b16 %v288, %v288
    %290 = vrot.lane.b32.xlu0 %v289, 32
    %v291 = vpop.permute.xlu0 %290
    %vm292 = vcmask 261120
    %v295 = vsel %vm292, %v285, %v291
    %v296 = vld [vmem:[%s5] sm:$0xf]
    %v297 = vld [vmem:[%s5 + $0x4] sm:$0xf]
    %v298 = vld [vmem:[%s5 + $0x8] sm:$0xf]
    %v299 = vld [vmem:[%s5 + $0xc] sm:$0xf]
    %v300 = vld [vmem:[%s5 + $0x10] sm:$0xf]
    %v301 = vld [vmem:[%s5 + $0x14] sm:$0xf]
    %v302 = vld [vmem:[%s5 + $0x18] sm:$0xf]
    %v303 = vld [vmem:[%s5 + $0x1c] sm:$0xf]
    %v304 = vld [vmem:[#allocation9 + $0x3] sm:$0x1]
    %v305 = vperm.slane %v304, 0
    %v314 = vunpack.c.l.b16 %v296
    %v315 = vunpack.c.l.b16 %v297
    %v316 = vunpack.c.l.b16 %v298
    %v317 = vunpack.c.l.b16 %v299
    %v318 = vunpack.c.l.b16 %v300
    %v319 = vunpack.c.l.b16 %v301
    %v320 = vunpack.c.l.b16 %v302
    %v321 = vunpack.c.l.b16 %v303
    %v322 = vpack.c.b16 %v315, %v314
    %v323 = vpack.c.b16 %v317, %v316
    %v324 = vpack.c.b16 %v319, %v318
    %v325 = vpack.c.b16 %v321, %v320
    %vm330 = vcmask 523264
    %v331 = vsel %vm330, %v295, 0
    %333 = vmatpush.bf16.msra.mxu0 0
    %334 = vmatpush.bf16.msra.mxu0 0
    %335 = vmatpush.bf16.msra.mxu0 0
    %336 = vmatpush.bf16.msra.mxu0 0
    %337 = vmatpush.bf16.msra.mxu0 %v325
    %338 = vmatpush.bf16.msra.mxu0 %v324
    %339 = vmatpush.bf16.msra.mxu0 %v323
    %340 = vmatpush.bf16.msra.mxu0 %v322
    %341 = vmatmul.bf16.gmra.mxu0 %v331
    %v342 = vpop.f32.mrf.mxu0
    %v343 = vadd.f32 %v305, %v342
    %v344 = vpop.f32.mrf.mxu0
    %345 = vdwg.mxu0
    %v346 = vtanh.pop %v343
    %v347 = vmul.f32 %v346, 0.5
    %v348 = vadd.f32 %v347, 0.5
    %350 = vrot.lane.b32.xlu0 %v284, 32
    %v351 = vpop.permute.xlu0 %350
    %v353 = vmul.f32 %v348, %v351
    %355 = vrot.lane.b32.xlu0 %v346, 64
    %v356 = vpop.permute.xlu0 %355
    %v358 = vmul.f32 %v348, %v356
    %360 = vrot.lane.b32.xlu0 %v358, 32
    %v361 = vpop.permute.xlu0 %360
    %v363 = vadd.f32 %v353, %v361
    %v364 = vtanh.pop %v363
    %366 = vrot.lane.b32.xlu0 %v364, 64
    %v367 = vpop.permute.xlu0 %366
    %v369 = vmul.f32 %v348, %v367
    %371 = vrot.lane.b32.xlu0 %v369, 32
    %v372 = vpop.permute.xlu0 %371
    %vm374 = vcmask 254976
    %375 = vst.msk [vmem:[#allocation2] sm:$0x3] %vm374, %v372
    %377 = vrot.lane.b32.xlu0 %v363, 96
    %v378 = vpop.permute.xlu0 %377
    %380 = vst.msk [vmem:[#allocation3] sm:$0x3] %vm374, %v378
    %s381 = scalar_lea.vmem [#allocation2], 2
    %v382 = vld [vmem:[%s381] sm:$0x3]
    %s383 = scalar_lea.vmem [#allocation3], 2
    %v384 = vld [vmem:[%s383] sm:$0x3]
    %v385 = vpack.c.bf16 %v369, %v369
    %v386 = vpack.c.bf16 %v382, %v382
    %v388 = vunpack.c.l.b16 %v385
    %v389 = vpack.c.b16 %v388, %v388
    %390 = vrot.lane.b32.xlu0 %v389, 32
    %v391 = vpop.permute.xlu0 %390
    %v393 = vunpack.c.l.b16 %v386
    %v394 = vpack.c.b16 %v393, %v393
    %395 = vrot.lane.b32.xlu0 %v394, 32
    %v396 = vpop.permute.xlu0 %395
    %v399 = vsel %vm292, %v391, %v396
    %s400 = scalar_lea.vmem %s5, 32
    %v401 = vld [vmem:[%s400] sm:$0xf]
    %v402 = vld [vmem:[%s400 + $0x4] sm:$0xf]
    %v403 = vld [vmem:[%s400 + $0x8] sm:$0xf]
    %v404 = vld [vmem:[%s400 + $0xc] sm:$0xf]
    %v405 = vld [vmem:[%s400 + $0x10] sm:$0xf]
    %v406 = vld [vmem:[%s400 + $0x14] sm:$0xf]
    %v407 = vld [vmem:[%s400 + $0x18] sm:$0xf]
    %v408 = vld [vmem:[%s400 + $0x1c] sm:$0xf]
    %v409 = vld [vmem:[#allocation9 + $0x4] sm:$0x1]
    %v410 = vperm.slane %v409, 0
    %v419 = vunpack.c.l.b16 %v401
    %v420 = vunpack.c.l.b16 %v402
    %v421 = vunpack.c.l.b16 %v403
    %v422 = vunpack.c.l.b16 %v404
    %v423 = vunpack.c.l.b16 %v405
    %v424 = vunpack.c.l.b16 %v406
    %v425 = vunpack.c.l.b16 %v407
    %v426 = vunpack.c.l.b16 %v408
    %v427 = vpack.c.b16 %v420, %v419
    %v428 = vpack.c.b16 %v422, %v421
    %v429 = vpack.c.b16 %v424, %v423
    %v430 = vpack.c.b16 %v426, %v425
    %v435 = vsel %vm330, %v399, 0
    %437 = vmatpush.bf16.msra.mxu0 0
    %438 = vmatpush.bf16.msra.mxu0 0
    %439 = vmatpush.bf16.msra.mxu0 0
    %440 = vmatpush.bf16.msra.mxu0 0
    %441 = vmatpush.bf16.msra.mxu0 %v430
    %442 = vmatpush.bf16.msra.mxu0 %v429
    %443 = vmatpush.bf16.msra.mxu0 %v428
    %444 = vmatpush.bf16.msra.mxu0 %v427
    %445 = vmatmul.bf16.gmra.mxu0 %v435
    %v446 = vpop.f32.mrf.mxu0
    %v447 = vadd.f32 %v410, %v446
    %v448 = vpop.f32.mrf.mxu0
    %449 = vdwg.mxu0
    %v450 = vtanh.pop %v447
    %v451 = vmul.f32 %v450, 0.5
    %v452 = vadd.f32 %v451, 0.5
    %454 = vrot.lane.b32.xlu0 %v384, 32
    %v455 = vpop.permute.xlu0 %454
    %v457 = vmul.f32 %v452, %v455
    %459 = vrot.lane.b32.xlu0 %v450, 64
    %v460 = vpop.permute.xlu0 %459
    %v462 = vmul.f32 %v452, %v460
    %464 = vrot.lane.b32.xlu0 %v462, 32
    %v465 = vpop.permute.xlu0 %464
    %v467 = vadd.f32 %v457, %v465
    %v468 = vtanh.pop %v467
    %470 = vrot.lane.b32.xlu0 %v468, 64
    %v471 = vpop.permute.xlu0 %470
    %v473 = vmul.f32 %v452, %v471
    %475 = vrot.lane.b32.xlu0 %v473, 32
    %v476 = vpop.permute.xlu0 %475
    %478 = vst.msk [vmem:[%s381] sm:$0x3] %vm374, %v476
    %480 = vrot.lane.b32.xlu0 %v467, 96
    %v481 = vpop.permute.xlu0 %480
    %483 = vst.msk [vmem:[%s383] sm:$0x3] %vm374, %v481
    %v484 = vpack.c.bf16 %v473, %v473
    %v485 = vld [vmem:[%s4 + $0x30] sm:$0xf]
    %v486 = vld [vmem:[%s4 + $0x34] sm:$0xf]
    %v487 = vld [vmem:[%s4 + $0x38] sm:$0xf]
    %v488 = vld [vmem:[%s4 + $0x3c] sm:$0xf]
    %v489 = vld [vmem:[#allocation9 + $0x2] sm:$0x1]
    %v490 = vperm.slane %v489, 0
    %492 = vrot.lane.b32.xlu0 %v484, 32
    %v493 = vpop.permute.xlu0 %492
    %v498 = vunpack.c.l.b16 %v485
    %v499 = vunpack.c.l.b16 %v486
    %v500 = vunpack.c.l.b16 %v487
    %v501 = vunpack.c.l.b16 %v488
    %v502 = vpack.c.b16 %v499, %v498
    %v503 = vpack.c.b16 %v501, %v500
    %v507 = vsel %vm292, %v493, 0
    %509 = vmatpush.bf16.msra.mxu0 0
    %510 = vmatpush.bf16.msra.mxu0 0
    %511 = vmatpush.bf16.msra.mxu0 0
    %512 = vmatpush.bf16.msra.mxu0 0
    %513 = vmatpush.bf16.msra.mxu0 0
    %514 = vmatpush.bf16.msra.mxu0 0
    %515 = vmatpush.bf16.msra.mxu0 %v503
    %516 = vmatpush.bf16.msra.mxu0 %v502
    %517 = vmatmul.bf16.gmra.mxu0 %v507
    %v518 = vpop.f32.mrf.mxu0
    %v519 = vadd.f32 %v490, %v518
    %v520 = vpop.f32.mrf.mxu0
    %521 = vdwg.mxu0
    %vm522 = vcmask 123904
    %v523 = vsel %vm522, %v519, -inf
    %524 = vmax.xlane.f32.xlu0 %v523
    %v525 = vpop.xlane.xlu0 %524
    %v526 = vsub.f32 %v519, %v525
    %v527 = vmul.f32 %v526, 1.442695
    %v528 = vpow.pop %v527
    %v529 = vsel %vm522, %v528, 0.0
    %530 = vadd.xlane.f32.xlu0 %v529
    %v531 = vpop.xlane.xlu0 %530
    %v532 = vlog2.pop %v531
    %v533 = vmul.f32 %v532, 0.6931472
    %v534 = vsub.f32 %v526, %v533
    %535 = vst.msk [vmem:[#allocation10] sm:$0x3] %vm522, %v534
    // Predicated region
    $region46: #{tpu_custom_call.1} parent=1 // pred_check
      %p536 = pneg %p77
    $region47: #{tpu_custom_call.1} parent=1 // pred_check_branch
      %538 = sbr.rel (%p536) target = $region49
    $region48: #{tpu_custom_call.1} parent=1 // pred_region
      %v539 = vld [vmem:[#allocation2] sm:$0x3]
      %v540 = vld [vmem:[#allocation2 + $0x2] sm:$0x3]
      %541 = vst.msk [vmem:[#allocation11] sm:$0x3] %vm374, %v539
      %542 = vst.msk [vmem:[#allocation11 + $0x2] sm:$0x3] %vm374, %v540
      %v543 = vld [vmem:[#allocation3] sm:$0x3]
      %v544 = vld [vmem:[#allocation3 + $0x2] sm:$0x3]
      %545 = vst.msk [vmem:[#allocation13] sm:$0x3] %vm374, %v543
      %546 = vst.msk [vmem:[#allocation13 + $0x2] sm:$0x3] %vm374, %v544
    $region49: #{tpu_custom_call.1} parent=1 // pred_fallthru
      _
    // Predicated region
    $region50: #{tpu_custom_call.1} parent=1 // pred_check
      _
    $region51: #{tpu_custom_call.1} parent=1 // pred_check_branch
      %548 = sbr.rel (0) target = $region53
    $region52: #{tpu_custom_call.1} parent=1 // pred_region
      %550 = vsyncadd [#allocation6], 0
      %s552 = sshll.u32 [#allocation10], 4
      %s553 = int_to_ptr.vmem [resolvable:$true] %s552
      %s554 = sshll.u32 %s7, 4
      %s555 = int_to_ptr.hbm [resolvable:$true] %s554
      %557 = dma.vmem_to_hbm [thread:$0]  %s553, 32, %s555, [#allocation6]
    $region53: #{tpu_custom_call.1} parent=1 // pred_fallthru
      _
    // Predicated region
    $region54: #{tpu_custom_call.1} parent=1 // pred_check
      _
    $region55: #{tpu_custom_call.1} parent=1 // pred_check_branch
      %559 = sbr.rel (0) target = $region57
    $region56: #{tpu_custom_call.1} parent=1 // pred_region
      %561 = vsyncadd [#allocation12], 0
      %s562 = sshll.u32 [#allocation11], 4
      %s563 = int_to_ptr.vmem [resolvable:$true] %s562
      %s564 = sshll.u32 %s8, 4
      %s565 = int_to_ptr.hbm [resolvable:$true] %s564
      %570 = dma.vmem_to_hbm [thread:$0]  %s563, 64, %s565, [#allocation12], 32, 32, 2
    $region57: #{tpu_custom_call.1} parent=1 // pred_fallthru
      _
    // Predicated region
    $region58: #{tpu_custom_call.1} parent=1 // pred_check
      _
    $region59: #{tpu_custom_call.1} parent=1 // pred_check_branch
      %572 = sbr.rel (0) target = $region61
    $region60: #{tpu_custom_call.1} parent=1 // pred_region
      %574 = vsyncadd [#allocation12], 0
      %s575 = sshll.u32 [#allocation13], 4
      %s576 = int_to_ptr.vmem [resolvable:$true] %s575
      %s577 = sshll.u32 %s9, 4
      %s578 = int_to_ptr.hbm [resolvable:$true] %s577
      %583 = dma.vmem_to_hbm [thread:$0]  %s576, 64, %s578, [#allocation12], 32, 32, 2
    $region61: #{tpu_custom_call.1} parent=1 // pred_fallthru
      _
    // Predicated region
    $region62: #{tpu_custom_call.1} parent=1 // pred_check
      _
    $region63: #{tpu_custom_call.1} parent=1 // pred_check_branch
      %585 = sbr.rel (0) target = $region65
    $region64: #{tpu_custom_call.1} parent=1 // pred_region
      %587 = dma.done [#allocation6], 32
    $region65: #{tpu_custom_call.1} parent=1 // pred_fallthru
      _
    // Predicated region
    $region66: #{tpu_custom_call.1} parent=1 // pred_check
      _
    $region67: #{tpu_custom_call.1} parent=1 // pred_check_branch
      %589 = sbr.rel (0) target = $region69
    $region68: #{tpu_custom_call.1} parent=1 // pred_region
      %591 = dma.done [#allocation12], 64
    $region69: #{tpu_custom_call.1} parent=1 // pred_fallthru
      _
    // Predicated region
    $region70: #{tpu_custom_call.1} parent=1 // pred_check
      _
    $region71: #{tpu_custom_call.1} parent=1 // pred_check_branch
      %593 = sbr.rel (0) target = $region73
    $region72: #{tpu_custom_call.1} parent=1 // pred_region
      %595 = dma.done [#allocation12], 64
    $region73: #{tpu_custom_call.1} parent=1 // pred_fallthru
      _
    %596 = vsyncpa [#allocation5], 1
    %597 = vsyncpa [#allocation8], 1
    %598 = vsyncpa [#allocation6], 1
    %599 = vsyncpa [#allocation12], 1

</llo_original>
